<compile_context>
chip_gen: v5e
topology: v5e:2x2
jax: 0.10.0
libtpu: 0.0.40
codegen_flags: <defaults>
</compile_context>

<pallas_src>
import jax
import jax.numpy as jnp
from jax.experimental import pallas as pl
from jax.experimental.pallas import tpu as pltpu


def _round_up(x, m):
    return ((x + m - 1) // m) * m


def _pad2d(x, rows, cols):
    r, c = x.shape
    if r == rows and c == cols:
        return x
    return jnp.pad(x, ((0, rows - r), (0, cols - c)))


def _make_mlp_kernel(num_layers, compute_dtype):
    """Kernel closed over the (static) layer count and MXU input dtype."""
    n = num_layers

    def kernel(*refs):
        # refs = [state, action, emb_table, W0_state, W0_emb, W1..W{n-1},
        #         b0..b{n-1}, out]
        state_ref, action_ref, emb_tab_ref = refs[0], refs[1], refs[2]
        w_refs = refs[3:4 + n]            # W0_state, W0_emb, W1, ..., W_{n-1}
        b_refs = refs[4 + n:4 + 2 * n]    # b0, ..., b_{n-1}
        out_ref = refs[4 + 2 * n]

        tb = state_ref.shape[0]
        action_size = emb_tab_ref.shape[0]

        # Fused embedding gather: exact row selection via one-hot matmul.
        lane_ids = jax.lax.broadcasted_iota(jnp.int32, (tb, action_size), 1)
        eq = lane_ids == action_ref[...]                       # [TB, action_size]
        onehot = jnp.where(eq,
                           jnp.ones((tb, action_size), compute_dtype),
                           jnp.zeros((tb, action_size), compute_dtype))
        emb = jnp.dot(onehot, emb_tab_ref[...],
                      preferred_element_type=jnp.float32).astype(compute_dtype)

        # Layer 0: concat(state, emb) @ W0 + b0, as a split matmul
        # (W0 pre-split in the wrapper; identical math).
        x = (jnp.dot(state_ref[...], w_refs[0][...],
                     preferred_element_type=jnp.float32)
             + jnp.dot(emb, w_refs[1][...],
                       preferred_element_type=jnp.float32)
             + b_refs[0][...])
        if n > 1:
            x = jnp.maximum(x, 0.0)

        # Remaining layers (last layer has no ReLU).
        for i in range(1, n):
            x = jnp.dot(x.astype(compute_dtype), w_refs[i + 1][...],
                        preferred_element_type=jnp.float32) + b_refs[i][...]
            if i < n - 1:
                x = jnp.maximum(x, 0.0)

        out_ref[...] = x.astype(out_ref.dtype)

    return kernel


def net_forward(state, action, emb_table, weights, biases,
                *, compute_dtype=jnp.bfloat16, batch_tile=512):
    """Forward pass equivalent to Net.forward((state, action)).

    weights[i]: (in_i, out_i) float32   (transposed w.r.t. torch Linear.weight)
    biases[i]:  (out_i,) or (1, out_i)  float32
    """
    B, state_dim = state.shape
    action_size, action_dim = emb_table.shape
    n = len(weights)
    out_dim = weights[-1].shape[1]
    assert weights[0].shape[0] == state_dim + action_dim

    # ---- pad layer widths (output dims) to lane multiples of 128 (exact) ----
    padded = [_round_up(w.shape[1], 128) for w in weights]

    w0 = weights[0].astype(jnp.float32)
    ws = [
        _pad2d(w0[:state_dim, :], state_dim, padded[0]).astype(compute_dtype),
        _pad2d(w0[state_dim:, :], action_dim, padded[0]).astype(compute_dtype),
    ]
    for i in range(1, n):
        ws.append(_pad2d(weights[i].astype(jnp.float32),
                         padded[i - 1], padded[i]).astype(compute_dtype))
    bs = [_pad2d(biases[i].astype(jnp.float32).reshape(1, -1), 1, padded[i])
          for i in range(n)]

    # ---- batch tiling (bf16 sublane pack = 16 rows) ----
    TB = min(batch_tile, _round_up(B, 16))
    B_pad = _round_up(B, TB)
    grid = (B_pad // TB,)

    state_p = _pad2d(state.astype(compute_dtype), B_pad, state_dim)
    action_p = jnp.zeros((B_pad, 1), jnp.int32).at[:B, 0].set(
        action.astype(jnp.int32))
    emb_c = emb_table.astype(compute_dtype)

    operands = [state_p, action_p, emb_c] + ws + bs

    # ---- BlockSpecs: activations tiled over batch, params resident ----
    def fixed(shape):
        return pl.BlockSpec(shape, lambda i: (0, 0))

    in_specs = (
        [pl.BlockSpec((TB, state_dim), lambda i: (i, 0)),
         pl.BlockSpec((TB, 1), lambda i: (i, 0)),
         fixed((action_size, action_dim))]
        + [fixed(tuple(w.shape)) for w in ws]
        + [fixed(tuple(b.shape)) for b in bs]
    )
    out_spec = pl.BlockSpec((TB, padded[-1]), lambda i: (i, 0))

    # ---- advisory cost estimate ----
    flops = 2 * B_pad * (action_size * action_dim
                         + state_dim * padded[0]
                         + action_dim * padded[0]
                         + sum(padded[i - 1] * padded[i] for i in range(1, n)))
    bytes_accessed = (sum(int(o.size) * o.dtype.itemsize for o in operands)
                      + B_pad * padded[-1] * 4)
    cost = pl.CostEstimate(flops=int(flops), transcendentals=0,
                           bytes_accessed=int(bytes_accessed))

    # ---- VMEM budget: resident params + double-buffered batch tiles ----
    param_bytes = (sum(int(w.size) * w.dtype.itemsize for w in ws)
                   + sum(int(b.size) * b.dtype.itemsize for b in bs)
                   + int(emb_c.size) * emb_c.dtype.itemsize)
    tile_bytes = 2 * (TB * state_dim * state_p.dtype.itemsize
                      + TB * 4
                      + TB * padded[-1] * 4)
    vmem_limit = int(min(max(param_bytes + tile_bytes + (8 << 20), 32 << 20),
                         64 << 20))

    out = pl.pallas_call(
        _make_mlp_kernel(n, compute_dtype),
        out_shape=jax.ShapeDtypeStruct((B_pad, padded[-1]), jnp.float32),
        grid=grid,
        in_specs=in_specs,
        out_specs=out_spec,
        compiler_params=pltpu.CompilerParams(
            dimension_semantics=("parallel",),
            vmem_limit_bytes=vmem_limit),
        cost_estimate=cost,
    )(*operands)

    return out[:B, :out_dim]


def init_params(key, shape, action_size, action_dim):
    """Deterministic synthetic parameters matching Net.__init__ shapes."""
    keys = jax.random.split(key, 2 * (len(shape) - 1) + 1)
    weights, biases = [], []
    for i in range(1, len(shape)):
        fan_in, fan_out = shape[i - 1], shape[i]
        w = jax.random.normal(keys[2 * (i - 1)], (fan_in, fan_out), jnp.float32) * 0.1
        b = jax.random.normal(keys[2 * (i - 1) + 1], (1, fan_out), jnp.float32) * 0.1
        weights.append(w)
        biases.append(b)
    emb_table = jax.random.normal(keys[-1], (action_size, action_dim), jnp.float32) * 0.1
    return weights, biases, emb_table


if __name__ == "__main__":
    # Small, self-consistent sizes: state_dim + action_dim == shape[0]
    batch = 8
    state_dim = 24
    action_dim = 8
    action_size = 10
    shape = [state_dim + action_dim, 64, 16]   # Linear(32,64)+ReLU, Linear(64,16)

    key = jax.random.PRNGKey(0)
    k_state, k_action, k_params = jax.random.split(key, 3)

    state = jax.random.normal(k_state, (batch, state_dim), jnp.float32)
    action = jax.random.randint(k_action, (batch,), 0, action_size, jnp.int32)
    weights, biases, emb_table = init_params(k_params, shape, action_size, action_dim)

    # Pure-JAX f32 reference (matches the torch module).
    emb_ref = jnp.take(emb_table, action, axis=0)
    x_ref = jnp.concatenate([state, emb_ref], axis=-1)
    for i, (w, b) in enumerate(zip(weights, biases)):
        x_ref = x_ref @ w + b
        if i < len(weights) - 1:
            x_ref = jnp.maximum(x_ref, 0.0)

    # 1) Bit-accurate structural check: f32 compute path.
    out_f32 = jax.block_until_ready(
        net_forward(state, action, emb_table, weights, biases,
                    compute_dtype=jnp.float32))
    assert out_f32.shape == (batch, shape[-1])
    assert jnp.allclose(out_f32, x_ref, atol=1e-4, rtol=1e-4)

    # 2) Fast path: bf16 MXU inputs with f32 accumulation.
    out_bf16 = jax.block_until_ready(
        net_forward(state, action, emb_table, weights, biases))
    assert out_bf16.shape == (batch, shape[-1])
    assert jnp.allclose(out_bf16, x_ref, atol=3e-2, rtol=3e-2)

    print("KERNEL_OK")
</pallas_src>

<mosaic_0001>
module attributes {stable_mosaic.version = 11 : i64} {
  func.func @kernel(%arg0: i32, %arg1: memref<16x24xf32, #tpu.memory_space<vmem>>, %arg2: memref<16x1xi32, #tpu.memory_space<vmem>>, %arg3: memref<10x8xf32, #tpu.memory_space<vmem>>, %arg4: memref<24x128xf32, #tpu.memory_space<vmem>>, %arg5: memref<8x128xf32, #tpu.memory_space<vmem>>, %arg6: memref<128x128xf32, #tpu.memory_space<vmem>>, %arg7: memref<1x128xf32, #tpu.memory_space<vmem>>, %arg8: memref<1x128xf32, #tpu.memory_space<vmem>>, %arg9: memref<16x128xf32, #tpu.memory_space<vmem>>) attributes {dimension_semantics = [#tpu.dimension_semantics<parallel>], iteration_bounds = array<i64: 1>, scalar_prefetch = 0 : i64, scratch_operands = 0 : i64, tpu.core_type = #tpu.core_type<tc>, window_params = [{transform_indices = @transform_0, window_bounds = array<i64: 16, 24>}, {transform_indices = @transform_1, window_bounds = array<i64: 16, 1>}, {pipeline_mode = #tpu.pipeline_mode<synchronous>, transform_indices = @transform_2, window_bounds = array<i64: 10, 8>}, {pipeline_mode = #tpu.pipeline_mode<synchronous>, transform_indices = @transform_3, window_bounds = array<i64: 24, 128>}, {pipeline_mode = #tpu.pipeline_mode<synchronous>, transform_indices = @transform_4, window_bounds = array<i64: 8, 128>}, {pipeline_mode = #tpu.pipeline_mode<synchronous>, transform_indices = @transform_5, window_bounds = array<i64: 128, 128>}, {pipeline_mode = #tpu.pipeline_mode<synchronous>, transform_indices = @transform_6, window_bounds = array<i64: 1, 128>}, {pipeline_mode = #tpu.pipeline_mode<synchronous>, transform_indices = @transform_7, window_bounds = array<i64: 1, 128>}, {transform_indices = @transform_8, window_bounds = array<i64: 16, 128>}]} {
    %0 = tpu.iota {dimensions = array<i32: 1>} : vector<16x10xi32>
    %c0 = arith.constant 0 : index
    %c0_0 = arith.constant 0 : index
    %1 = vector.load %arg2[%c0, %c0_0] : memref<16x1xi32, #tpu.memory_space<vmem>>, vector<16x1xi32>
    %2 = vector.broadcast %1 : vector<16x1xi32> to vector<16x10xi32>
    %3 = arith.cmpi eq, %0, %2 : vector<16x10xi32>
    %cst = arith.constant 1.000000e+00 : f32
    %4 = vector.broadcast %cst : f32 to vector<16x10xf32>
    %cst_1 = arith.constant 0.000000e+00 : f32
    %5 = vector.broadcast %cst_1 : f32 to vector<16x10xf32>
    %6 = arith.select %3, %4, %5 : vector<16x10xi1>, vector<16x10xf32>
    %c0_2 = arith.constant 0 : index
    %c0_3 = arith.constant 0 : index
    %7 = vector.load %arg3[%c0_2, %c0_3] : memref<10x8xf32, #tpu.memory_space<vmem>>, vector<10x8xf32>
    %cst_4 = arith.constant dense<0.000000e+00> : vector<16x8xf32>
    %8 = tpu.matmul %6, %7, %cst_4 {dimension_numbers = #tpu.dot_dimension_numbers<[1], [0], [0], [1], [0, 0, 1, 1], [], []>} : vector<16x10xf32>, vector<10x8xf32>, vector<16x8xf32> -> vector<16x8xf32>
    %c0_5 = arith.constant 0 : index
    %c0_6 = arith.constant 0 : index
    %9 = vector.load %arg1[%c0_5, %c0_6] : memref<16x24xf32, #tpu.memory_space<vmem>>, vector<16x24xf32>
    %c0_7 = arith.constant 0 : index
    %c0_8 = arith.constant 0 : index
    %10 = vector.load %arg4[%c0_7, %c0_8] : memref<24x128xf32, #tpu.memory_space<vmem>>, vector<24x128xf32>
    %cst_9 = arith.constant dense<0.000000e+00> : vector<16x128xf32>
    %11 = tpu.matmul %9, %10, %cst_9 {dimension_numbers = #tpu.dot_dimension_numbers<[1], [0], [0], [1], [0, 0, 1, 1], [], []>} : vector<16x24xf32>, vector<24x128xf32>, vector<16x128xf32> -> vector<16x128xf32>
    %c0_10 = arith.constant 0 : index
    %c0_11 = arith.constant 0 : index
    %12 = vector.load %arg5[%c0_10, %c0_11] : memref<8x128xf32, #tpu.memory_space<vmem>>, vector<8x128xf32>
    %cst_12 = arith.constant dense<0.000000e+00> : vector<16x128xf32>
    %13 = tpu.matmul %8, %12, %cst_12 {dimension_numbers = #tpu.dot_dimension_numbers<[1], [0], [0], [1], [0, 0, 1, 1], [], []>} : vector<16x8xf32>, vector<8x128xf32>, vector<16x128xf32> -> vector<16x128xf32>
    %14 = arith.addf %11, %13 : vector<16x128xf32>
    %c0_13 = arith.constant 0 : index
    %c0_14 = arith.constant 0 : index
    %15 = vector.load %arg7[%c0_13, %c0_14] : memref<1x128xf32, #tpu.memory_space<vmem>>, vector<1x128xf32>
    %16 = vector.broadcast %15 : vector<1x128xf32> to vector<16x128xf32>
    %17 = arith.addf %14, %16 : vector<16x128xf32>
    %cst_15 = arith.constant 0.000000e+00 : f32
    %18 = vector.broadcast %cst_15 : f32 to vector<16x128xf32>
    %19 = arith.maximumf %17, %18 : vector<16x128xf32>
    %c0_16 = arith.constant 0 : index
    %c0_17 = arith.constant 0 : index
    %20 = vector.load %arg6[%c0_16, %c0_17] : memref<128x128xf32, #tpu.memory_space<vmem>>, vector<128x128xf32>
    %cst_18 = arith.constant dense<0.000000e+00> : vector<16x128xf32>
    %21 = tpu.matmul %19, %20, %cst_18 {dimension_numbers = #tpu.dot_dimension_numbers<[1], [0], [0], [1], [0, 0, 1, 1], [], []>} : vector<16x128xf32>, vector<128x128xf32>, vector<16x128xf32> -> vector<16x128xf32>
    %c0_19 = arith.constant 0 : index
    %c0_20 = arith.constant 0 : index
    %22 = vector.load %arg8[%c0_19, %c0_20] : memref<1x128xf32, #tpu.memory_space<vmem>>, vector<1x128xf32>
    %23 = vector.broadcast %22 : vector<1x128xf32> to vector<16x128xf32>
    %24 = arith.addf %21, %23 : vector<16x128xf32>
    %c0_21 = arith.constant 0 : index
    %c0_22 = arith.constant 0 : index
    %25 = vector.load %arg9[%c0_21, %c0_22] : memref<16x128xf32, #tpu.memory_space<vmem>>, vector<16x128xf32>
    tpu.vector_store %arg9[%c0_21, %c0_22], %24 {strides = array<i32>} : memref<16x128xf32, #tpu.memory_space<vmem>>, vector<16x128xf32>,
    return
  }
  func.func @transform_0(%arg0: i32) -> (i32, i32) {
    %c0_i32 = arith.constant 0 : i32
    %c0_i32_0 = arith.constant 0 : i32
    return %arg0, %c0_i32 : i32, i32
  }
  func.func @transform_1(%arg0: i32) -> (i32, i32) {
    %c0_i32 = arith.constant 0 : i32
    %c0_i32_0 = arith.constant 0 : i32
    return %arg0, %c0_i32 : i32, i32
  }
  func.func @transform_2(%arg0: i32) -> (i32, i32) {
    %c0_i32 = arith.constant 0 : i32
    %c0_i32_0 = arith.constant 0 : i32
    %c0_i32_1 = arith.constant 0 : i32
    return %c0_i32, %c0_i32_0 : i32, i32
  }
  func.func @transform_3(%arg0: i32) -> (i32, i32) {
    %c0_i32 = arith.constant 0 : i32
    %c0_i32_0 = arith.constant 0 : i32
    %c0_i32_1 = arith.constant 0 : i32
    return %c0_i32, %c0_i32_0 : i32, i32
  }
  func.func @transform_4(%arg0: i32) -> (i32, i32) {
    %c0_i32 = arith.constant 0 : i32
    %c0_i32_0 = arith.constant 0 : i32
    %c0_i32_1 = arith.constant 0 : i32
    return %c0_i32, %c0_i32_0 : i32, i32
  }
  func.func @transform_5(%arg0: i32) -> (i32, i32) {
    %c0_i32 = arith.constant 0 : i32
    %c0_i32_0 = arith.constant 0 : i32
    %c0_i32_1 = arith.constant 0 : i32
    return %c0_i32, %c0_i32_0 : i32, i32
  }
  func.func @transform_6(%arg0: i32) -> (i32, i32) {
    %c0_i32 = arith.constant 0 : i32
    %c0_i32_0 = arith.constant 0 : i32
    %c0_i32_1 = arith.constant 0 : i32
    return %c0_i32, %c0_i32_0 : i32, i32
  }
  func.func @transform_7(%arg0: i32) -> (i32, i32) {
    %c0_i32 = arith.constant 0 : i32
    %c0_i32_0 = arith.constant 0 : i32
    %c0_i32_1 = arith.constant 0 : i32
    return %c0_i32, %c0_i32_0 : i32, i32
  }
  func.func @transform_8(%arg0: i32) -> (i32, i32) {
    %c0_i32 = arith.constant 0 : i32
    %c0_i32_0 = arith.constant 0 : i32
    return %arg0, %c0_i32 : i32, i32
  }
}

</mosaic_0001>

<llo_original>
// kernel: tpu_custom_call.1
$region0: #{tpu_custom_call.1}
  #allocation0 [shape = 'u32[]', space=smem, size = 0x4, offset = 0x4, fixed_abs, tag = 'smem constant byte address 0x4 - core index']
  #allocation1 [shape = 'u32[72,128]{1,0:T(1,128)}', space=vmem, size = 0x9000, scoped, tag = 'internal scratch']
  %s0 = inlined_call_operand.vmem [shape: f32[16,24], index: 0, kind: input, shape index: {}]
  %s1 = inlined_call_operand.vmem [shape: s32[16,1], index: 1, kind: input, shape index: {}]
  %s2 = inlined_call_operand.vmem [shape: f32[10,8], index: 2, kind: input, shape index: {}]
  %s3 = inlined_call_operand.vmem [shape: f32[24,128], index: 3, kind: input, shape index: {}]
  %s4 = inlined_call_operand.hbm [shape: f32[8,128], index: 4, kind: input, shape index: {}]
  %s5 = inlined_call_operand.hbm [shape: f32[128,128], index: 5, kind: input, shape index: {}]
  %s6 = inlined_call_operand.vmem [shape: f32[1,128], index: 6, kind: input, shape index: {}]
  %s7 = inlined_call_operand.vmem [shape: f32[1,128], index: 7, kind: input, shape index: {}]
  %s8 = inlined_call_operand.hbm [shape: f32[16,128], index: 8, kind: output, shape index: {}]
  %s9 = sld [smem:[#allocation0]]
  $region50: #{tpu_custom_call.1} parent=0
    _
  %s11 = ssub.s32 1, %s9
  %s12 = scalar_select 0, %s11, %s9
  $region1: #{tpu_custom_call.1} parent=0
    #allocation2 [shape = 'u8[4096]{0}', space=vmem, size = 0x1000, scoped, tag = 'input window, operand 4, single buffered']
    #allocation3 [shape = 's32[1]{0}', space=sflag, size = 0x4, scoped, tag = 'scoped memory for tpu_custom_call.1']
    #allocation4 [shape = 's32[1]{0}', space=sflag, size = 0x4, scoped, tag = 'scoped memory for tpu_custom_call.1']
    #allocation5 [shape = 'u8[65536]{0}', space=vmem, size = 0x10000, scoped, tag = 'input window, operand 5, single buffered']
    #allocation6 [shape = 's32[1]{0}', space=sflag, size = 0x4, scoped, tag = 'scoped memory for tpu_custom_call.1']
    #allocation7 [shape = 'u8[8192]{0}', space=vmem, size = 0x2000, scoped, tag = 'output window, operand 0, single buffered']
    %13 = vsyncpa [#allocation3], 0
    %14 = vsyncpa [#allocation6], 0
    %15 = vsyncpa [#allocation4], 0
    // Predicated region
    $region2: #{tpu_custom_call.1} parent=1 // pred_check
      _
    $region3: #{tpu_custom_call.1} parent=1 // pred_check_branch
      %17 = sbr.rel (0) target = $region5
    $region4: #{tpu_custom_call.1} parent=1 // pred_region
      _
    $region5: #{tpu_custom_call.1} parent=1 // pred_fallthru
      _
    // Predicated region
    $region6: #{tpu_custom_call.1} parent=1 // pred_check
      _
    $region7: #{tpu_custom_call.1} parent=1 // pred_check_branch
      %19 = sbr.rel (0) target = $region9
    $region8: #{tpu_custom_call.1} parent=1 // pred_region
      _
    $region9: #{tpu_custom_call.1} parent=1 // pred_fallthru
      _
    // Predicated region
    $region10: #{tpu_custom_call.1} parent=1 // pred_check
      _
    $region11: #{tpu_custom_call.1} parent=1 // pred_check_branch
      %21 = sbr.rel (0) target = $region13
    $region12: #{tpu_custom_call.1} parent=1 // pred_region
      _
    $region13: #{tpu_custom_call.1} parent=1 // pred_fallthru
      _
    // Predicated region
    $region14: #{tpu_custom_call.1} parent=1 // pred_check
      _
    $region15: #{tpu_custom_call.1} parent=1 // pred_check_branch
      %23 = sbr.rel (0) target = $region17
    $region16: #{tpu_custom_call.1} parent=1 // pred_region
      _
    $region17: #{tpu_custom_call.1} parent=1 // pred_fallthru
      _
    // Predicated region
    $region18: #{tpu_custom_call.1} parent=1 // pred_check
      _
    $region19: #{tpu_custom_call.1} parent=1 // pred_check_branch
      %25 = sbr.rel (0) target = $region21
    $region20: #{tpu_custom_call.1} parent=1 // pred_region
      %27 = vsyncadd [#allocation3], 0
      %s29 = sshll.u32 %s4, 4
      %s30 = int_to_ptr.hbm [resolvable:$true] %s29
      %s31 = sshll.u32 [#allocation2], 4
      %s32 = int_to_ptr.vmem [resolvable:$true] %s31
      %34 = dma.hbm_to_vmem [thread:$0]  %s30, 128, %s32, [#allocation3]
    $region21: #{tpu_custom_call.1} parent=1 // pred_fallthru
      _
    // Predicated region
    $region22: #{tpu_custom_call.1} parent=1 // pred_check
      _
    $region23: #{tpu_custom_call.1} parent=1 // pred_check_branch
      %36 = sbr.rel (0) target = $region25
    $region24: #{tpu_custom_call.1} parent=1 // pred_region
      %38 = vsyncadd [#allocation6], 0
      %s39 = sshll.u32 %s5, 4
      %s40 = int_to_ptr.hbm [resolvable:$true] %s39
      %s41 = sshll.u32 [#allocation5], 4
      %s42 = int_to_ptr.vmem [resolvable:$true] %s41
      %47 = dma.hbm_to_vmem [thread:$0]  %s40, 2048, %s42, [#allocation6], 128, 128, 8
    $region25: #{tpu_custom_call.1} parent=1 // pred_fallthru
      _
    // Predicated region
    $region26: #{tpu_custom_call.1} parent=1 // pred_check
      _
    $region27: #{tpu_custom_call.1} parent=1 // pred_check_branch
      %49 = sbr.rel (0) target = $region29
    $region28: #{tpu_custom_call.1} parent=1 // pred_region
      _
    $region29: #{tpu_custom_call.1} parent=1 // pred_fallthru
      _
    // Predicated region
    $region30: #{tpu_custom_call.1} parent=1 // pred_check
      _
    $region31: #{tpu_custom_call.1} parent=1 // pred_check_branch
      %51 = sbr.rel (0) target = $region33
    $region32: #{tpu_custom_call.1} parent=1 // pred_region
      _
    $region33: #{tpu_custom_call.1} parent=1 // pred_fallthru
      _
    // Predicated region
    $region34: #{tpu_custom_call.1} parent=1 // pred_check
      _
    $region35: #{tpu_custom_call.1} parent=1 // pred_check_branch
      %53 = sbr.rel (0) target = $region37
    $region36: #{tpu_custom_call.1} parent=1 // pred_region
      %55 = dma.done [#allocation3], 128
    $region37: #{tpu_custom_call.1} parent=1 // pred_fallthru
      _
    // Predicated region
    $region38: #{tpu_custom_call.1} parent=1 // pred_check
      _
    $region39: #{tpu_custom_call.1} parent=1 // pred_check_branch
      %57 = sbr.rel (0) target = $region41
    $region40: #{tpu_custom_call.1} parent=1 // pred_region
      %59 = dma.done [#allocation6], 2048
    $region41: #{tpu_custom_call.1} parent=1 // pred_fallthru
      _
    %v60 = vlaneseq
    %v61 = vand.u32 %v60, 127
    %v62 = vld [vmem:[%s1] sm:$0xff]
    %v63 = vld [vmem:[%s1 + $0x8] sm:$0xff]
    %64 = vset.pattern.permute.xlu0 0
    %65 = vperm.xlu0 %64, %v62
    %v66 = vpop.permute.xlu0 %65
    %67 = vset.pattern.permute.xlu0 0
    %68 = vperm.xlu0 %67, %v63
    %v69 = vpop.permute.xlu0 %68
    %vm70 = vcmp.eq.s32.totalorder %v61, %v66
    %vm71 = vcmp.eq.s32.totalorder %v61, %v69
    %v72 = vsel %vm70, 1.0, 0.0
    %v73 = vsel %vm71, 1.0, 0.0
    %v74 = vld [vmem:[%s2] sm:$0xff]
    %v75 = vld [vmem:[%s2 + $0x8] sm:$0x3]
    %vm76 = vcmask 80896
    %v78 = vsel %vm76, %v72, 0
    %v81 = vsel %vm76, %v73, 0
    %vm83 = vcmask 1041408
    %v85 = vsel %vm83, %v75, 0
    %87 = vmatpush.msra.mxu0 0.0
    %88 = vmatpush.msra.mxu0 0.0
    %89 = vmatpush.msra.mxu0 0.0
    %90 = vmatpush.msra.mxu0 0.0
    %91 = vmatpush.msra.mxu0 0.0
    %92 = vmatpush.msra.mxu0 0.0
    %93 = vmatpush.msra.mxu0 0.0
    %94 = vmatpush.msra.mxu0 0.0
    %95 = vmatpush.msra.mxu0 0.0
    %96 = vmatpush.msra.mxu0 0.0
    %97 = vmatpush.msra.mxu0 0.0
    %98 = vmatpush.msra.mxu0 0.0
    %99 = vmatpush.msra.mxu0 0.0
    %100 = vmatpush.msra.mxu0 0.0
    %101 = vmatpush.msra.mxu0 %v85
    %102 = vmatpush.msra.mxu0 %v74
    %103 = vmatmul.f32.gmra.mxu0 %v78
    %v104 = vpop.f32.mrf.mxu0
    %v105 = vadd.f32 0.0, %v104
    %106 = vmatmul.f32.gmra.mxu0 %v81
    %v107 = vpop.f32.mrf.mxu0
    %v108 = vadd.f32 0.0, %v107
    %109 = vdwg.mxu0
    %v110 = vld [vmem:[%s0] sm:$0xff]
    %v111 = vld [vmem:[%s0 + $0x8] sm:$0xff]
    %v112 = vld [vmem:[%s3] sm:$0xff]
    %v113 = vld [vmem:[%s3 + $0x8] sm:$0xff]
    %v114 = vld [vmem:[%s3 + $0x10] sm:$0xff]
    %v115 = vld [vmem:[#allocation2] sm:$0xff]
    %vm116 = vcmask 64512
    %v118 = vsel %vm116, %v105, 0
    %v121 = vsel %vm116, %v108, 0
    %123 = vmatpush.msra.mxu0 0.0
    %124 = vmatpush.msra.mxu0 0.0
    %125 = vmatpush.msra.mxu0 0.0
    %126 = vmatpush.msra.mxu0 0.0
    %127 = vmatpush.msra.mxu0 0.0
    %128 = vmatpush.msra.mxu0 0.0
    %129 = vmatpush.msra.mxu0 0.0
    %130 = vmatpush.msra.mxu0 0.0
    %131 = vmatpush.msra.mxu0 0.0
    %132 = vmatpush.msra.mxu0 0.0
    %133 = vmatpush.msra.mxu0 0.0
    %134 = vmatpush.msra.mxu0 0.0
    %135 = vmatpush.msra.mxu0 0.0
    %136 = vmatpush.msra.mxu0 0.0
    %137 = vmatpush.msra.mxu0 0.0
    %138 = vmatpush.msra.mxu0 %v115
    %139 = vmatmul.f32.gmra.mxu0 %v118
    %v140 = vpop.f32.mrf.mxu0
    %v141 = vadd.f32 0.0, %v140
    %142 = vmatmul.f32.gmra.mxu0 %v121
    %v143 = vpop.f32.mrf.mxu0
    %v144 = vadd.f32 0.0, %v143
    %145 = vdwg.mxu0
    %vm146 = vcmask 195584
    %v148 = vsel %vm146, %v110, 0
    %v151 = vsel %vm146, %v111, 0
    %153 = vmatpush.msra.mxu0 0.0
    %154 = vmatpush.msra.mxu0 0.0
    %155 = vmatpush.msra.mxu0 0.0
    %156 = vmatpush.msra.mxu0 0.0
    %157 = vmatpush.msra.mxu0 0.0
    %158 = vmatpush.msra.mxu0 0.0
    %159 = vmatpush.msra.mxu0 0.0
    %160 = vmatpush.msra.mxu0 0.0
    %161 = vmatpush.msra.mxu0 0.0
    %162 = vmatpush.msra.mxu0 0.0
    %163 = vmatpush.msra.mxu0 0.0
    %164 = vmatpush.msra.mxu0 0.0
    %165 = vmatpush.msra.mxu0 0.0
    %166 = vmatpush.msra.mxu0 %v114
    %167 = vmatpush.msra.mxu0 %v113
    %168 = vmatpush.msra.mxu0 %v112
    %169 = vmatmul.f32.gmra.mxu0 %v148
    %v170 = vpop.f32.mrf.mxu0
    %v171 = vadd.f32 %v141, %v170
    %172 = vmatmul.f32.gmra.mxu0 %v151
    %v173 = vpop.f32.mrf.mxu0
    %v174 = vadd.f32 %v144, %v173
    %175 = vdwg.mxu0
    %v176 = vld [vmem:[%s6] sm:$0x1]
    %v178 = vperm.slane %v176, 0
    %v180 = vadd.f32 %v171, %v178
    %v181 = vadd.f32 %v174, %v178
    %v182 = vmax.f32 %v180, 0.0
    %v183 = vmax.f32 %v181, 0.0
    %v184 = vld [vmem:[#allocation5] sm:$0xff]
    %v185 = vld [vmem:[#allocation5 + $0x8] sm:$0xff]
    %v186 = vld [vmem:[#allocation5 + $0x10] sm:$0xff]
    %v187 = vld [vmem:[#allocation5 + $0x18] sm:$0xff]
    %v188 = vld [vmem:[#allocation5 + $0x20] sm:$0xff]
    %v189 = vld [vmem:[#allocation5 + $0x28] sm:$0xff]
    %v190 = vld [vmem:[#allocation5 + $0x30] sm:$0xff]
    %v191 = vld [vmem:[#allocation5 + $0x38] sm:$0xff]
    %v192 = vld [vmem:[#allocation5 + $0x40] sm:$0xff]
    %v193 = vld [vmem:[#allocation5 + $0x48] sm:$0xff]
    %v194 = vld [vmem:[#allocation5 + $0x50] sm:$0xff]
    %v195 = vld [vmem:[#allocation5 + $0x58] sm:$0xff]
    %v196 = vld [vmem:[#allocation5 + $0x60] sm:$0xff]
    %v197 = vld [vmem:[#allocation5 + $0x68] sm:$0xff]
    %v198 = vld [vmem:[#allocation5 + $0x70] sm:$0xff]
    %v199 = vld [vmem:[#allocation5 + $0x78] sm:$0xff]
    %v200 = vld [vmem:[%s7] sm:$0x1]
    %v202 = vperm.slane %v200, 0
    %204 = vmatpush.msra.mxu0 %v199
    %205 = vmatpush.msra.mxu0 %v198
    %206 = vmatpush.msra.mxu0 %v197
    %207 = vmatpush.msra.mxu0 %v196
    %208 = vmatpush.msra.mxu0 %v195
    %209 = vmatpush.msra.mxu0 %v194
    %210 = vmatpush.msra.mxu0 %v193
    %211 = vmatpush.msra.mxu0 %v192
    %212 = vmatpush.msra.mxu0 %v191
    %213 = vmatpush.msra.mxu0 %v190
    %214 = vmatpush.msra.mxu0 %v189
    %215 = vmatpush.msra.mxu0 %v188
    %216 = vmatpush.msra.mxu0 %v187
    %217 = vmatpush.msra.mxu0 %v186
    %218 = vmatpush.msra.mxu0 %v185
    %219 = vmatpush.msra.mxu0 %v184
    %220 = vmatmul.f32.gmra.mxu0 %v182
    %v221 = vpop.f32.mrf.mxu0
    %v222 = vadd.f32 %v202, %v221
    %223 = vmatmul.f32.gmra.mxu0 %v183
    %v224 = vpop.f32.mrf.mxu0
    %v225 = vadd.f32 %v202, %v224
    %226 = vdwg.mxu0
    %227 = vst [vmem:[#allocation7] sm:$0xff] %v222
    %228 = vst [vmem:[#allocation7 + $0x8] sm:$0xff] %v225
    // Predicated region
    $region42: #{tpu_custom_call.1} parent=1 // pred_check
      _
    $region43: #{tpu_custom_call.1} parent=1 // pred_check_branch
      %230 = sbr.rel (0) target = $region45
    $region44: #{tpu_custom_call.1} parent=1 // pred_region
      %232 = vsyncadd [#allocation4], 0
      %s233 = sshll.u32 [#allocation7], 4
      %s234 = int_to_ptr.vmem [resolvable:$true] %s233
      %s235 = sshll.u32 %s8, 4
      %s236 = int_to_ptr.hbm [resolvable:$true] %s235
      %241 = dma.vmem_to_hbm [thread:$0]  %s234, 256, %s236, [#allocation4], 128, 128, 8
    $region45: #{tpu_custom_call.1} parent=1 // pred_fallthru
      _
    // Predicated region
    $region46: #{tpu_custom_call.1} parent=1 // pred_check
      _
    $region47: #{tpu_custom_call.1} parent=1 // pred_check_branch
      %243 = sbr.rel (0) target = $region49
    $region48: #{tpu_custom_call.1} parent=1 // pred_region
      %245 = dma.done [#allocation4], 256
    $region49: #{tpu_custom_call.1} parent=1 // pred_fallthru
      _
    %246 = vsyncpa [#allocation3], 1
    %247 = vsyncpa [#allocation6], 1
    %248 = vsyncpa [#allocation4], 1

</llo_original>
